<compile_context>
chip_gen: v7x
topology: tpu7x:2x2x1
jax: 0.10.0
libtpu: 0.0.40
codegen_flags: <defaults>
</compile_context>

<pallas_src>
import math
import functools

import jax
import jax.numpy as jnp
import numpy as np
from jax import lax
from jax.experimental import pallas as pl
from jax.experimental.pallas import tpu as pltpu


def _pick_tile(dim, target, align):
    """Largest tile <= target that evenly divides `dim` and is a multiple of `align`;
    falls back to the full dim (a block equal to the array dim is always legal)."""
    if dim <= target:
        return dim
    t = target
    while t >= align:
        if dim % t == 0:
            return t
        t //= 2
    return dim


# ----------------------------------------------------------------------------
# Kernel 1: tiled linear  o = x @ W^T + b   (torch nn.Linear weight layout (N, K))
# ----------------------------------------------------------------------------
def _linear_kernel(x_ref, w_ref, b_ref, o_ref, acc_ref):
    k = pl.program_id(2)

    @pl.when(k == 0)
    def _():
        acc_ref[...] = jnp.zeros_like(acc_ref)

    # x: (tm, tk), w: (tn, tk) -> contract the last dim of BOTH operands
    # (no in-kernel .T, so no XLU relayout of the weight tile).
    acc_ref[...] += lax.dot_general(
        x_ref[...], w_ref[...],
        dimension_numbers=(((1,), (1,)), ((), ())),
        preferred_element_type=jnp.float32)

    @pl.when(k == pl.num_programs(2) - 1)
    def _():
        o_ref[...] = (acc_ref[...] + b_ref[...]).astype(o_ref.dtype)


def pallas_linear(x, w, b, *, tm=256, tn=256, tk=512):
    """x: (M, K), w: (N, K) [torch nn.Linear layout], b: (N,) -> (M, N) float32."""
    M, K = x.shape
    N = w.shape[0]
    tm = _pick_tile(M, tm, 8)
    tn = _pick_tile(N, tn, 128)
    tk = _pick_tile(K, tk, 128)
    grid = (M // tm, N // tn, K // tk)
    cost = pl.CostEstimate(
        flops=2 * M * N * K,
        transcendentals=0,
        bytes_accessed=4 * (M * K + N * K + M * N + N))
    return pl.pallas_call(
        _linear_kernel,
        out_shape=jax.ShapeDtypeStruct((M, N), jnp.float32),
        grid=grid,
        in_specs=[
            pl.BlockSpec((tm, tk), lambda i, j, k: (i, k)),
            pl.BlockSpec((tn, tk), lambda i, j, k: (j, k)),
            pl.BlockSpec((1, tn), lambda i, j, k: (0, j)),
        ],
        out_specs=pl.BlockSpec((tm, tn), lambda i, j, k: (i, j)),
        scratch_shapes=[pltpu.VMEM((tm, tn), jnp.float32)],
        compiler_params=pltpu.CompilerParams(
            dimension_semantics=("parallel", "parallel", "arbitrary")),
        cost_estimate=cost,
    )(x, w, b.reshape(1, N))


# ----------------------------------------------------------------------------
# Kernel 2: flash-style multihead attention on (B, S, D) q and (B, S, 2D) kv.
# Heads are split inside the kernel (static column slices), online softmax over
# KV tiles, accumulator is a lane-dense (tq, D) VMEM block -> output blocks are
# (1, tq, D) full-width stores and no post-kernel head transpose is needed.
# ----------------------------------------------------------------------------
def _flash_attention_kernel(q_ref, kv_ref, o_ref, m_sc, l_sc, acc_sc,
                            *, num_heads, head_dim):
    ki = pl.program_id(2)

    @pl.when(ki == 0)
    def _():
        m_sc[...] = jnp.full_like(m_sc, -jnp.inf)
        l_sc[...] = jnp.zeros_like(l_sc)
        acc_sc[...] = jnp.zeros_like(acc_sc)

    q = q_ref[...]          # (tq, D)
    kv = kv_ref[...]        # (tkv, 2D)
    scale = 1.0 / math.sqrt(head_dim)

    for h in range(num_heads):   # static unroll over heads
        q_cols = slice(h * head_dim, (h + 1) * head_dim)
        k_cols = slice(2 * h * head_dim, 2 * h * head_dim + head_dim)
        v_cols = slice(2 * h * head_dim + head_dim, 2 * (h + 1) * head_dim)

        q_h = q[:, q_cols]           # (tq, hd)
        k_h = kv[:, k_cols]          # (tkv, hd)
        v_h = kv[:, v_cols]          # (tkv, hd)

        # scores: contract head_dim of both operands (no in-kernel transpose).
        s = lax.dot_general(
            q_h, k_h,
            dimension_numbers=(((1,), (1,)), ((), ())),
            preferred_element_type=jnp.float32) * scale      # (tq, tkv)

        m_prev = m_sc[h]                                     # (tq, 1)
        l_prev = l_sc[h]
        m_new = jnp.maximum(m_prev, jnp.max(s, axis=-1, keepdims=True))
        alpha = jnp.exp(m_prev - m_new)
        p = jnp.exp(s - m_new)                               # (tq, tkv)
        l_sc[h] = alpha * l_prev + jnp.sum(p, axis=-1, keepdims=True)
        m_sc[h] = m_new

        acc_sc[:, q_cols] = alpha * acc_sc[:, q_cols] + jnp.dot(
            p, v_h, preferred_element_type=jnp.float32)

    @pl.when(ki == pl.num_programs(2) - 1)
    def _():
        for h in range(num_heads):
            l_h = l_sc[h]
            inv = pl.reciprocal(l_h, approx=True)    # EUP slot (otherwise idle)
            inv = inv * (2.0 - l_h * inv)            # one Newton step -> f32 accuracy
            cols = slice(h * head_dim, (h + 1) * head_dim)
            o_ref[:, cols] = (acc_sc[:, cols] * inv).astype(o_ref.dtype)


def pallas_flash_attention(q, kv, num_heads, *, tq=256, tkv=512):
    """q: (B, S, D), kv: (B, S, 2D) -> values (B, S, D) with heads concatenated."""
    B, S, D = q.shape
    assert D % num_heads == 0
    head_dim = D // num_heads
    tq = _pick_tile(S, tq, 8)
    tkv = _pick_tile(S, tkv, 8)
    grid = (B, S // tq, S // tkv)
    kern = functools.partial(_flash_attention_kernel,
                             num_heads=num_heads, head_dim=head_dim)
    cost = pl.CostEstimate(
        flops=4 * B * S * S * D,
        transcendentals=B * num_heads * S * S,
        bytes_accessed=4 * (B * S * D + B * S * 2 * D + B * S * D))
    return pl.pallas_call(
        kern,
        out_shape=jax.ShapeDtypeStruct((B, S, D), jnp.float32),
        grid=grid,
        in_specs=[
            pl.BlockSpec((None, tq, D), lambda b, qi, ki: (b, qi, 0)),
            pl.BlockSpec((None, tkv, 2 * D), lambda b, qi, ki: (b, ki, 0)),
        ],
        out_specs=pl.BlockSpec((None, tq, D), lambda b, qi, ki: (b, qi, 0)),
        scratch_shapes=[
            pltpu.VMEM((num_heads, tq, 1), jnp.float32),   # running max m
            pltpu.VMEM((num_heads, tq, 1), jnp.float32),   # running denom l
            pltpu.VMEM((tq, D), jnp.float32),              # lane-dense accumulator
        ],
        compiler_params=pltpu.CompilerParams(
            dimension_semantics=("parallel", "parallel", "arbitrary")),
        cost_estimate=cost,
    )(q, kv)


# ----------------------------------------------------------------------------
# Module: deterministic parameter init + forward
# ----------------------------------------------------------------------------
def init_params(key, d_model):
    ks = jax.random.split(key, 6)
    bound = 1.0 / math.sqrt(d_model)
    return {
        "kv_w": jax.random.uniform(ks[0], (2 * d_model, d_model), jnp.float32, -bound, bound),
        "kv_b": jax.random.uniform(ks[1], (2 * d_model,), jnp.float32, -bound, bound),
        "q_w": jax.random.uniform(ks[2], (d_model, d_model), jnp.float32, -bound, bound),
        "q_b": jax.random.uniform(ks[3], (d_model,), jnp.float32, -bound, bound),
        "o_w": jax.random.uniform(ks[4], (d_model, d_model), jnp.float32, -bound, bound),
        "o_b": jax.random.uniform(ks[5], (d_model,), jnp.float32, -bound, bound),
    }


def multihead_cross_attention(params, x, y, num_heads):
    """x, y: (B, S, D) float32 -> (B, S, D) float32."""
    B, S, D = x.shape
    assert D % num_heads == 0

    kv = pallas_linear(x.reshape(B * S, D), params["kv_w"], params["kv_b"])  # (BS, 2D)
    q = pallas_linear(y.reshape(B * S, D), params["q_w"], params["q_b"])     # (BS, D)

    # No transposes: attention kernel splits heads from the (B,S,D)/(B,S,2D) layout.
    values = pallas_flash_attention(q.reshape(B, S, D),
                                    kv.reshape(B, S, 2 * D), num_heads)      # (B,S,D)

    out = pallas_linear(values.reshape(B * S, D), params["o_w"], params["o_b"])
    return out.reshape(B, S, D)


# ----------------------------------------------------------------------------
# Pure-JAX reference (matches the PyTorch module's semantics, incl. K/V chunk)
# ----------------------------------------------------------------------------
def reference(params, x, y, num_heads):
    B, S, D = x.shape
    hd = D // num_heads
    kv = x @ params["kv_w"].T + params["kv_b"]
    q = y @ params["q_w"].T + params["q_b"]
    kv = kv.reshape(B, S, num_heads, 2 * hd).transpose(0, 2, 1, 3)
    q = q.reshape(B, S, num_heads, hd).transpose(0, 2, 1, 3)
    k, v = kv[..., :hd], kv[..., hd:]
    s = jnp.einsum("bhqd,bhkd->bhqk", q, k) / math.sqrt(hd)
    a = jax.nn.softmax(s, axis=-1)
    vals = jnp.einsum("bhqk,bhkd->bhqd", a, v)
    vals = vals.transpose(0, 2, 1, 3).reshape(B, S, D)
    return vals @ params["o_w"].T + params["o_b"]


if __name__ == "__main__":
    key = jax.random.PRNGKey(0)
    kp, kx, ky, k1, k2, k3 = jax.random.split(key, 6)

    # --- config 1: small shape implied by the module spec --------------------
    B, S, D, H = 2, 8, 32, 4
    params = init_params(kp, D)
    x = jax.random.normal(kx, (B, S, D), jnp.float32)
    y = jax.random.normal(ky, (B, S, D), jnp.float32)
    out = jax.block_until_ready(multihead_cross_attention(params, x, y, H))
    ref = reference(params, x, y, H)
    np.testing.assert_allclose(np.asarray(out), np.asarray(ref), rtol=1e-3, atol=1e-3)

    # --- config 2: larger shape exercising the tiled matmul grid and the
    #               multi-KV-tile online-softmax path --------------------------
    B2, S2, D2, H2 = 1, 1024, 256, 8
    params2 = init_params(k1, D2)
    x2 = jax.random.normal(k2, (B2, S2, D2), jnp.float32)
    y2 = jax.random.normal(k3, (B2, S2, D2), jnp.float32)
    out2 = jax.block_until_ready(multihead_cross_attention(params2, x2, y2, H2))
    ref2 = reference(params2, x2, y2, H2)
    np.testing.assert_allclose(np.asarray(out2), np.asarray(ref2), rtol=1e-3, atol=1e-3)

    # --- direct check of the K-reduction accumulator path in the tiled linear --
    xa = jax.random.normal(jax.random.PRNGKey(1), (256, 512), jnp.float32)
    wa = jax.random.normal(jax.random.PRNGKey(2), (128, 512), jnp.float32) * 0.05
    ba = jax.random.normal(jax.random.PRNGKey(3), (128,), jnp.float32)
    outa = jax.block_until_ready(pallas_linear(xa, wa, ba, tm=128, tn=128, tk=128))
    np.testing.assert_allclose(np.asarray(outa), np.asarray(xa @ wa.T + ba),
                               rtol=1e-3, atol=1e-3)

    print("KERNEL_OK")
</pallas_src>

<mosaic_0001>
module attributes {stable_mosaic.version = 11 : i64} {
  func.func @_linear_kernel(%arg0: i32, %arg1: i32, %arg2: i32, %arg3: memref<16x32xf32, #tpu.memory_space<vmem>>, %arg4: memref<64x32xf32, #tpu.memory_space<vmem>>, %arg5: memref<1x64xf32, #tpu.memory_space<vmem>>, %arg6: memref<16x64xf32, #tpu.memory_space<vmem>>, %arg7: memref<16x64xf32, #tpu.memory_space<vmem>>) attributes {dimension_semantics = [#tpu.dimension_semantics<parallel>, #tpu.dimension_semantics<parallel>, #tpu.dimension_semantics<arbitrary>], iteration_bounds = array<i64: 1, 1, 1>, scalar_prefetch = 0 : i64, scratch_operands = 1 : i64, tpu.core_type = #tpu.core_type<tc>, window_params = [{transform_indices = @transform_0, window_bounds = array<i64: 16, 32>}, {transform_indices = @transform_1, window_bounds = array<i64: 64, 32>}, {transform_indices = @transform_2, window_bounds = array<i64: 1, 64>}, {transform_indices = @transform_3, window_bounds = array<i64: 16, 64>}]} {
    %c0_i32 = arith.constant 0 : i32
    %0 = arith.cmpi eq, %arg2, %c0_i32 : i32
    %1 = arith.extui %0 : i1 to i32
    %c0_i32_0 = arith.constant 0 : i32
    %2 = arith.cmpi ne, %1, %c0_i32_0 : i32
    scf.if %2 {
      %cst_10 = arith.constant 0.000000e+00 : f32
      %12 = vector.broadcast %cst_10 : f32 to vector<16x64xf32>
      %c0_11 = arith.constant 0 : index
      %c0_12 = arith.constant 0 : index
      %13 = vector.load %arg7[%c0_11, %c0_12] : memref<16x64xf32, #tpu.memory_space<vmem>>, vector<16x64xf32>
      tpu.vector_store %arg7[%c0_11, %c0_12], %12 {strides = array<i32>} : memref<16x64xf32, #tpu.memory_space<vmem>>, vector<16x64xf32>,
    } else {
    }
    %c0 = arith.constant 0 : index
    %c0_1 = arith.constant 0 : index
    %3 = vector.load %arg7[%c0, %c0_1] : memref<16x64xf32, #tpu.memory_space<vmem>>, vector<16x64xf32>
    %c0_2 = arith.constant 0 : index
    %c0_3 = arith.constant 0 : index
    %4 = vector.load %arg3[%c0_2, %c0_3] : memref<16x32xf32, #tpu.memory_space<vmem>>, vector<16x32xf32>
    %c0_4 = arith.constant 0 : index
    %c0_5 = arith.constant 0 : index
    %5 = vector.load %arg4[%c0_4, %c0_5] : memref<64x32xf32, #tpu.memory_space<vmem>>, vector<64x32xf32>
    %cst = arith.constant dense<0.000000e+00> : vector<16x64xf32>
    %6 = tpu.matmul %4, %5, %cst {dimension_numbers = #tpu.dot_dimension_numbers<[1], [1], [0], [0], [0, 0, 1, 0], [], []>} : vector<16x32xf32>, vector<64x32xf32>, vector<16x64xf32> -> vector<16x64xf32>
    %7 = arith.addf %3, %6 : vector<16x64xf32>
    %c0_6 = arith.constant 0 : index
    %c0_7 = arith.constant 0 : index
    %8 = vector.load %arg7[%c0_6, %c0_7] : memref<16x64xf32, #tpu.memory_space<vmem>>, vector<16x64xf32>
    tpu.vector_store %arg7[%c0_6, %c0_7], %7 {strides = array<i32>} : memref<16x64xf32, #tpu.memory_space<vmem>>, vector<16x64xf32>,
    %c0_i32_8 = arith.constant 0 : i32
    %9 = arith.cmpi eq, %arg2, %c0_i32_8 : i32
    %10 = arith.extui %9 : i1 to i32
    %c0_i32_9 = arith.constant 0 : i32
    %11 = arith.cmpi ne, %10, %c0_i32_9 : i32
    scf.if %11 {
      %c0_10 = arith.constant 0 : index
      %c0_11 = arith.constant 0 : index
      %12 = vector.load %arg7[%c0_10, %c0_11] : memref<16x64xf32, #tpu.memory_space<vmem>>, vector<16x64xf32>
      %c0_12 = arith.constant 0 : index
      %c0_13 = arith.constant 0 : index
      %13 = vector.load %arg5[%c0_12, %c0_13] : memref<1x64xf32, #tpu.memory_space<vmem>>, vector<1x64xf32>
      %14 = vector.broadcast %13 : vector<1x64xf32> to vector<16x64xf32>
      %15 = arith.addf %12, %14 : vector<16x64xf32>
      %c0_14 = arith.constant 0 : index
      %c0_15 = arith.constant 0 : index
      %16 = vector.load %arg6[%c0_14, %c0_15] : memref<16x64xf32, #tpu.memory_space<vmem>>, vector<16x64xf32>
      tpu.vector_store %arg6[%c0_14, %c0_15], %15 {strides = array<i32>} : memref<16x64xf32, #tpu.memory_space<vmem>>, vector<16x64xf32>,
    } else {
    }
    return
  }
  func.func @transform_0(%arg0: i32, %arg1: i32, %arg2: i32) -> (i32, i32) {
    %c0_i32 = arith.constant 0 : i32
    return %arg0, %arg2 : i32, i32
  }
  func.func @transform_1(%arg0: i32, %arg1: i32, %arg2: i32) -> (i32, i32) {
    %c0_i32 = arith.constant 0 : i32
    return %arg1, %arg2 : i32, i32
  }
  func.func @transform_2(%arg0: i32, %arg1: i32, %arg2: i32) -> (i32, i32) {
    %c0_i32 = arith.constant 0 : i32
    %c0_i32_0 = arith.constant 0 : i32
    return %c0_i32, %arg1 : i32, i32
  }
  func.func @transform_3(%arg0: i32, %arg1: i32, %arg2: i32) -> (i32, i32) {
    %c0_i32 = arith.constant 0 : i32
    return %arg0, %arg1 : i32, i32
  }
}

</mosaic_0001>

<llo_original>
// kernel: tpu_custom_call.1
$region0: #{tpu_custom_call.1}
  #allocation0 [shape = 'u32[]', space=smem, size = 0x4, offset = 0x4, fixed_abs, tag = 'smem constant byte address 0x4 - core index']
  #allocation1 [shape = 'u32[144,128]{1,0:T(1,128)}', space=vmem, size = 0x12000, scoped, tag = 'internal scratch']
  #allocation2 [shape = 'f32[16,64]{1,0:T(8,128)}', space=vmem, size = 0x2000, scoped, tag = 'scratch operand']
  %s0 = inlined_call_operand.vmem [shape: f32[16,32], index: 0, kind: input, shape index: {}]
  %s1 = inlined_call_operand.vmem [shape: f32[64,32], index: 1, kind: input, shape index: {}]
  %s2 = inlined_call_operand.vmem [shape: f32[1,64], index: 2, kind: input, shape index: {}]
  %s3 = inlined_call_operand.hbm [shape: f32[16,64], index: 3, kind: output, shape index: {}]
  %s4 = sld [smem:[#allocation0]]
  $region30: #{tpu_custom_call.1} parent=0
    _
  %s6 = ssub.s32 1, %s4
  %s7 = scalar_select 0, %s6, %s4
  $region1: #{tpu_custom_call.1} parent=0
    #allocation3 [shape = 'u8[8192]{0}', space=vmem, size = 0x2000, scoped, tag = 'output window, operand 0, single buffered']
    #allocation4 [shape = 's32[1]{0}', space=sflag, size = 0x4, scoped, tag = 'scoped memory for tpu_custom_call.1']
    %8 = vsyncpa [#allocation4], 0
    // Predicated region
    $region2: #{tpu_custom_call.1} parent=1 // pred_check
      _
    $region3: #{tpu_custom_call.1} parent=1 // pred_check_branch
      %10 = sbr.rel (0) target = $region5
    $region4: #{tpu_custom_call.1} parent=1 // pred_region
      _
    $region5: #{tpu_custom_call.1} parent=1 // pred_fallthru
      _
    // Predicated region
    $region6: #{tpu_custom_call.1} parent=1 // pred_check
      _
    $region7: #{tpu_custom_call.1} parent=1 // pred_check_branch
      %12 = sbr.rel (0) target = $region9
    $region8: #{tpu_custom_call.1} parent=1 // pred_region
      _
    $region9: #{tpu_custom_call.1} parent=1 // pred_fallthru
      _
    // Predicated region
    $region10: #{tpu_custom_call.1} parent=1 // pred_check
      _
    $region11: #{tpu_custom_call.1} parent=1 // pred_check_branch
      %14 = sbr.rel (0) target = $region13
    $region12: #{tpu_custom_call.1} parent=1 // pred_region
      _
    $region13: #{tpu_custom_call.1} parent=1 // pred_fallthru
      _
    %p15 = scmp.eq.s32.totalorder 0, 0
    // Predicated region
    $region14: #{tpu_custom_call.1} parent=1 // pred_check
      %p16 = pneg %p15
    $region15: #{tpu_custom_call.1} parent=1 // pred_check_branch
      %18 = sbr.rel (%p16) target = $region17
    $region16: #{tpu_custom_call.1} parent=1 // pred_region
      %vm19 = vcmask 523264
      %20 = vst.msk [vmem:[#allocation2] sm:$0xff] %vm19, 0.0
      %21 = vst.msk [vmem:[#allocation2 + $0x8] sm:$0xff] %vm19, 0.0
    $region17: #{tpu_custom_call.1} parent=1 // pred_fallthru
      _
    %v22 = vld [vmem:[#allocation2] sm:$0xff]
    %v23 = vld [vmem:[#allocation2 + $0x8] sm:$0xff]
    %v24 = vld [vmem:[%s0] sm:$0xff]
    %v25 = vld [vmem:[%s0 + $0x8] sm:$0xff]
    %v26 = vld [vmem:[%s1] sm:$0xff]
    %v27 = vld [vmem:[%s1 + $0x8] sm:$0xff]
    %v28 = vld [vmem:[%s1 + $0x10] sm:$0xff]
    %v29 = vld [vmem:[%s1 + $0x18] sm:$0xff]
    %v30 = vld [vmem:[%s1 + $0x20] sm:$0xff]
    %v31 = vld [vmem:[%s1 + $0x28] sm:$0xff]
    %v32 = vld [vmem:[%s1 + $0x30] sm:$0xff]
    %v33 = vld [vmem:[%s1 + $0x38] sm:$0xff]
    %vm34 = vcmask 261120
    %v36 = vsel %vm34, %v24, 0
    %v39 = vsel %vm34, %v25, 0
    %v42 = vsel %vm34, %v26, 0
    %v45 = vsel %vm34, %v27, 0
    %v48 = vsel %vm34, %v28, 0
    %v51 = vsel %vm34, %v29, 0
    %v54 = vsel %vm34, %v30, 0
    %v57 = vsel %vm34, %v31, 0
    %v60 = vsel %vm34, %v32, 0
    %v63 = vsel %vm34, %v33, 0
    %65 = vmatprep.subr.mxu0 0.0
    %66 = vmatpush1.xpose.msra.mxu0 %v42
    %67 = vmatprep.subr.mxu0 0.0
    %68 = vmatpush1.xpose.msra.mxu0 %v45
    %69 = vmatprep.subr.mxu0 0.0
    %70 = vmatpush1.xpose.msra.mxu0 %v48
    %71 = vmatprep.subr.mxu0 0.0
    %72 = vmatpush1.xpose.msra.mxu0 %v51
    %73 = vmatprep.subr.mxu0 0.0
    %74 = vmatpush1.xpose.msra.mxu0 %v54
    %75 = vmatprep.subr.mxu0 0.0
    %76 = vmatpush1.xpose.msra.mxu0 %v57
    %77 = vmatprep.subr.mxu0 0.0
    %78 = vmatpush1.xpose.msra.mxu0 %v60
    %79 = vmatprep.subr.mxu0 0.0
    %80 = vmatpush1.xpose.msra.mxu0 %v63
    %81 = vmatprep.subr.mxu0 0.0
    %82 = vmatpush1.xpose.msra.mxu0 0.0
    %83 = vmatprep.subr.mxu0 0.0
    %84 = vmatpush1.xpose.msra.mxu0 0.0
    %85 = vmatprep.subr.mxu0 0.0
    %86 = vmatpush1.xpose.msra.mxu0 0.0
    %87 = vmatprep.subr.mxu0 0.0
    %88 = vmatpush1.xpose.msra.mxu0 0.0
    %89 = vmatprep.subr.mxu0 0.0
    %90 = vmatpush1.xpose.msra.mxu0 0.0
    %91 = vmatprep.subr.mxu0 0.0
    %92 = vmatpush1.xpose.msra.mxu0 0.0
    %93 = vmatprep.subr.mxu0 0.0
    %94 = vmatpush1.xpose.msra.mxu0 0.0
    %95 = vmatprep.subr.mxu0 0.0
    %96 = vmatpush1.xpose.msra.mxu0 0.0
    %97 = vmatprep.subr.mxu0 0.0
    %98 = vmatpush1.xpose.msra.mxu0 0.0
    %99 = vmatprep.subr.mxu0 0.0
    %100 = vmatpush1.xpose.msra.mxu0 0.0
    %101 = vmatprep.subr.mxu0 0.0
    %102 = vmatpush1.xpose.msra.mxu0 0.0
    %103 = vmatprep.subr.mxu0 0.0
    %104 = vmatpush1.xpose.msra.mxu0 0.0
    %105 = vmatprep.subr.mxu0 0.0
    %106 = vmatpush1.xpose.msra.mxu0 0.0
    %107 = vmatprep.subr.mxu0 0.0
    %108 = vmatpush1.xpose.msra.mxu0 0.0
    %109 = vmatprep.subr.mxu0 0.0
    %110 = vmatpush1.xpose.msra.mxu0 0.0
    %111 = vmatprep.subr.mxu0 0.0
    %112 = vmatpush1.xpose.msra.mxu0 0.0
    %113 = vmatprep.subr.mxu0 0.0
    %114 = vmatpush1.xpose.msra.mxu0 0.0
    %115 = vmatprep.subr.mxu0 0.0
    %116 = vmatpush1.xpose.msra.mxu0 0.0
    %117 = vmatprep.subr.mxu0 0.0
    %118 = vmatpush1.xpose.msra.mxu0 0.0
    %119 = vmatprep.subr.mxu0 0.0
    %120 = vmatpush1.xpose.msra.mxu0 0.0
    %121 = vmatprep.subr.mxu0 0.0
    %122 = vmatpush1.xpose.msra.mxu0 0.0
    %123 = vmatprep.subr.mxu0 0.0
    %124 = vmatpush1.xpose.msra.mxu0 0.0
    %125 = vmatprep.subr.mxu0 0.0
    %126 = vmatpush1.xpose.msra.mxu0 0.0
    %127 = vmatprep.subr.mxu0 0.0
    %128 = vmatpush1.xpose.msra.mxu0 0.0
    %129 = vmatprep.mubr.f32.mxu0 0.0
    %130 = vmatmul.mubr.f32.gmra.mrb[0].mxu0 %v36
    %v131 = vpop.f32.mrb[0].mxu0
    %v132 = vadd.f32 0.0, %v131
    %v133 = vpop.f32.mrb[0].mxu0
    %134 = vmatprep.mubr.f32.mxu0 0.0
    %135 = vmatmul.mubr.f32.gmra.mrb[0].mxu0 %v39
    %v136 = vpop.f32.mrb[0].mxu0
    %v137 = vadd.f32 0.0, %v136
    %v138 = vpop.f32.mrb[0].mxu0
    %139 = vdwg.mxu0
    %v140 = vadd.f32 %v22, %v132
    %v141 = vadd.f32 %v23, %v137
    %vm142 = vcmask 523264
    %143 = vst.msk [vmem:[#allocation2] sm:$0xff] %vm142, %v140
    %144 = vst.msk [vmem:[#allocation2 + $0x8] sm:$0xff] %vm142, %v141
    // Predicated region
    $region18: #{tpu_custom_call.1} parent=1 // pred_check
      %p145 = pneg %p15
    $region19: #{tpu_custom_call.1} parent=1 // pred_check_branch
      %147 = sbr.rel (%p145) target = $region21
    $region20: #{tpu_custom_call.1} parent=1 // pred_region
      %v148 = vld [vmem:[#allocation2] sm:$0xff]
      %v149 = vld [vmem:[#allocation2 + $0x8] sm:$0xff]
      %v150 = vld [vmem:[%s2] sm:$0x1]
      %v152 = vlaneseq
      %v153 = vshrl.u32 %v152, 7
      %v154 = vsub.s32 0, %v153
      %v155 = vrot.slane %v150, %v154
      %v157 = vadd.f32 %v148, %v155
      %v158 = vadd.f32 %v149, %v155
      %159 = vst.msk [vmem:[#allocation3] sm:$0xff] %vm142, %v157
      %160 = vst.msk [vmem:[#allocation3 + $0x8] sm:$0xff] %vm142, %v158
    $region21: #{tpu_custom_call.1} parent=1 // pred_fallthru
      _
    // Predicated region
    $region22: #{tpu_custom_call.1} parent=1 // pred_check
      _
    $region23: #{tpu_custom_call.1} parent=1 // pred_check_branch
      %162 = sbr.rel (0) target = $region25
    $region24: #{tpu_custom_call.1} parent=1 // pred_region
      %s164 = ssub.s32 256, 256
      %165 = vsyncadd [#allocation4], %s164
      %s166 = sshll.u32 [#allocation3], 4
      %s167 = int_to_ptr.vmem [resolvable:$true] %s166
      %172 = dma.vmem_to_hbm [thread:$0]  %s167, 256, %s3, [#allocation4], 128, 128, 8
    $region25: #{tpu_custom_call.1} parent=1 // pred_fallthru
      _
    // Predicated region
    $region26: #{tpu_custom_call.1} parent=1 // pred_check
      _
    $region27: #{tpu_custom_call.1} parent=1 // pred_check_branch
      %174 = sbr.rel (0) target = $region29
    $region28: #{tpu_custom_call.1} parent=1 // pred_region
      %175 = dma.done [#allocation4], 256
    $region29: #{tpu_custom_call.1} parent=1 // pred_fallthru
      _
    %176 = vsyncpa [#allocation4], 1

</llo_original>
